<compile_context>
chip_gen: v6e
topology: v6e:2x2x1
jax: 0.10.0
libtpu: 0.0.40
codegen_flags: <defaults>
</compile_context>

<pallas_src>
import jax
import jax.numpy as jnp
from jax.experimental import pallas as pl
from jax.experimental.pallas import tpu as pltpu


def _round_up(x, m):
    return ((x + m - 1) // m) * m


def _cdiv(a, b):
    return (a + b - 1) // b


def _vmem_capacity_bytes():
    """Best-effort per-core VMEM capacity; conservative fallback (v7x = 64 MiB/TC)."""
    try:
        info = pltpu.get_tpu_info()
        for attr in ("vmem_capacity_bytes", "vmem_size_bytes", "vmem_bytes"):
            v = getattr(info, attr, None)
            if v:
                return int(v)
    except Exception:
        pass
    return 64 * 1024 * 1024


# ---------------------------------------------------------------------------
# Kernel: out = relu(x @ W1 + b1) @ W2 + b2
# grid = (batch_tiles, hidden_tiles). The hidden axis is a reduction
# ("arbitrary") carried in an f32 VMEM accumulator; batch axis is "parallel".
# ---------------------------------------------------------------------------
def mlp_kernel(x_ref, w1_ref, b1_ref, w2_ref, b2_ref, o_ref, acc_ref):
    k = pl.program_id(1)

    @pl.when(k == 0)
    def _init():
        acc_ref[...] = jnp.zeros_like(acc_ref)

    x = x_ref[...]
    if x.dtype != w1_ref.dtype:          # optional bf16 MXU path
        x = x.astype(w1_ref.dtype)

    # hidden tile: relu(x @ W1[:, k] + b1[k]); f32 accumulation on the MXU.
    h = jnp.dot(x, w1_ref[...], preferred_element_type=jnp.float32)
    b1v = b1_ref[...]
    if b1v.dtype != jnp.float32:
        b1v = b1v.astype(jnp.float32)
    h = jnp.maximum(h + b1v, 0.0)
    if h.dtype != w2_ref.dtype:
        h = h.astype(w2_ref.dtype)

    acc_ref[...] += jnp.dot(h, w2_ref[...], preferred_element_type=jnp.float32)

    @pl.when(k == pl.num_programs(1) - 1)
    def _finalize():
        b2v = b2_ref[...]
        if b2v.dtype != jnp.float32:
            b2v = b2v.astype(jnp.float32)
        o_ref[...] = (acc_ref[...] + b2v).astype(o_ref.dtype)


def prepare_params(w1, b1, w2, b2, *, compute_dtype=None):
    """Pad parameters once (outside the hot path) to lane-dense multiples of 128.

    w1: (F, H), b1: (H,)/(1,H), w2: (H, O), b2: (O,)/(1,O) -- (in, out) layout.
    Zero padding is semantics-preserving (padded x cols hit zero weight rows,
    padded hidden cols have zero weights + bias, padded out cols are sliced off).
    """
    F, H = w1.shape
    O = w2.shape[1]
    Fp, Hp, Op = _round_up(F, 128), _round_up(H, 128), _round_up(O, 128)
    b1 = b1.reshape(1, -1)
    b2 = b2.reshape(1, -1)
    if compute_dtype is not None:        # e.g. jnp.bfloat16 for 3-4x MXU throughput
        w1, w2 = w1.astype(compute_dtype), w2.astype(compute_dtype)
        b1, b2 = b1.astype(compute_dtype), b2.astype(compute_dtype)
    if (Fp, Hp) != (F, H):
        w1 = jnp.zeros((Fp, Hp), w1.dtype).at[:F, :H].set(w1)
    if Hp != H:
        b1 = jnp.zeros((1, Hp), b1.dtype).at[:, :H].set(b1)
    if (Hp, Op) != (H, O):
        w2 = jnp.zeros((Hp, Op), w2.dtype).at[:H, :O].set(w2)
    if Op != O:
        b2 = jnp.zeros((1, Op), b2.dtype).at[:, :O].set(b2)
    return dict(w1=w1, b1=b1, w2=w2, b2=b2, dims=(F, H, O))


def cnn_forward(x, params, *, block_batch=1024):
    """Forward pass of the PyTorch `CNN` module. x: (B, F) -> (B, O)."""
    w1, b1, w2, b2 = params["w1"], params["b1"], params["w2"], params["b2"]
    F, H, O = params["dims"]
    B = x.shape[0]
    Fp, Hp = w1.shape
    Op = w2.shape[1]
    out_dtype = x.dtype
    x_item = jnp.dtype(x.dtype).itemsize
    w_item = jnp.dtype(w1.dtype).itemsize

    # ---- minimal activation padding: 8-row sublane alignment + lane-dense F ----
    B8 = _round_up(max(B, 1), 8)
    if (B8, Fp) != x.shape:
        x = jnp.zeros((B8, Fp), x.dtype).at[:B, :F].set(x)

    # ---- VMEM-aware tile selection ---------------------------------------------
    cap = _vmem_capacity_bytes()
    budget = cap // 2                    # v5e/v6e: ~64 MiB, v7x: ~32 MiB per TC

    def vmem_need(tm_, hk_, single_w):
        wbuf = 1 if single_w else 2
        resident = wbuf * (Fp * hk_ + hk_ * Op + hk_ + Op) * w_item
        streamed = 2 * tm_ * (Fp + Op) * x_item      # double-buffered x / out
        scratch = tm_ * Op * 4 + tm_ * hk_ * 4       # f32 acc + hidden intermediate
        return resident + streamed + scratch

    def fits(tm_, hk_):
        return vmem_need(tm_, hk_, single_w=(hk_ == Hp)) * 1.2 <= budget

    tm = min(block_batch, B8)
    if tm >= 256:
        tm = (tm // 256) * 256           # keep the 256-wide MXU fully fed
    if B8 >= 512 and tm >= B8:           # >=2 grid steps -> both v7x TensorCores
        tm = _round_up(_cdiv(B8, 2), 256)
    tm_min = 256 if B8 >= 256 else 8

    hk = Hp
    while not fits(tm, hk) and tm > tm_min:
        tm = max(tm_min, _round_up(tm // 2, 8))
    while not fits(tm, hk) and hk > 128:
        hk = max(128, _round_up(hk // 2, 128))

    # Hidden-dim (K) tiling: pad H so hk divides it (only hit for very large
    # hidden layers whose weights would not otherwise fit in VMEM, e.g. v7x).
    Hg = _round_up(Hp, hk)
    if Hg != Hp:
        w1 = jnp.zeros((Fp, Hg), w1.dtype).at[:, :Hp].set(w1)
        b1 = jnp.zeros((1, Hg), b1.dtype).at[:, :Hp].set(b1)
        w2 = jnp.zeros((Hg, Op), w2.dtype).at[:Hp, :].set(w2)
    kt = Hg // hk
    bt = _cdiv(B8, tm)

    cost = pl.CostEstimate(
        flops=2 * B8 * (Fp * Hg + Hg * Op),
        transcendentals=0,
        bytes_accessed=(x.size * x_item
                        + (w1.size + b1.size + w2.size + b2.size) * w_item
                        + B8 * Op * x_item),
    )

    def build_call(single_weight_buffers):
        need = vmem_need(tm, hk, single_weight_buffers)
        vmem_limit = None
        if need * 1.2 > 14 * 1024 * 1024:    # covers v5e's 16 MiB scoped default
            vmem_limit = min(max(int(need * 1.4), 16 * 1024 * 1024),
                             int(cap * 0.75))
        wkw = {}
        if single_weight_buffers and hasattr(pl, "Buffered"):
            wkw = dict(pipeline_mode=pl.Buffered(1))   # grid-invariant -> 1 buffer
        in_specs = [
            pl.BlockSpec((tm, Fp), lambda i, k: (i, 0)),           # batch-tiled x
            pl.BlockSpec((Fp, hk), lambda i, k: (0, k), **wkw),    # W1
            pl.BlockSpec((1, hk), lambda i, k: (0, k), **wkw),     # b1
            pl.BlockSpec((hk, Op), lambda i, k: (k, 0), **wkw),    # W2
            pl.BlockSpec((1, Op), lambda i, k: (0, 0), **wkw),     # b2
        ]
        return pl.pallas_call(
            mlp_kernel,
            out_shape=jax.ShapeDtypeStruct((B8, Op), out_dtype),
            grid=(bt, kt),
            in_specs=in_specs,
            out_specs=pl.BlockSpec((tm, Op), lambda i, k: (i, 0)),
            scratch_shapes=[pltpu.VMEM((tm, Op), jnp.float32)],
            compiler_params=pltpu.CompilerParams(
                dimension_semantics=("parallel", "arbitrary"),
                vmem_limit_bytes=vmem_limit,
            ),
            cost_estimate=cost,
        )

    try:
        out = build_call(single_weight_buffers=(kt == 1))(x, w1, b1, w2, b2)
    except Exception:
        # Fallback if pipeline_mode=pl.Buffered(1) is unsupported on this JAX build.
        out = build_call(single_weight_buffers=False)(x, w1, b1, w2, b2)

    return out[:B, :O]


def init_params(key, n_feature, n_hidden, n_output, dtype=jnp.float32):
    """PyTorch Linear-style init (uniform +-1/sqrt(fan_in)), weights as (in, out)."""
    k1, k2, k3, k4 = jax.random.split(key, 4)
    bound1 = 1.0 / (n_feature ** 0.5)
    bound2 = 1.0 / (n_hidden ** 0.5)
    w1 = jax.random.uniform(k1, (n_feature, n_hidden), dtype, -bound1, bound1)
    b1 = jax.random.uniform(k2, (1, n_hidden), dtype, -bound1, bound1)
    w2 = jax.random.uniform(k3, (n_hidden, n_output), dtype, -bound2, bound2)
    b2 = jax.random.uniform(k4, (1, n_output), dtype, -bound2, bound2)
    return w1, b1, w2, b2


if __name__ == "__main__":
    key = jax.random.PRNGKey(0)
    kx, kp = jax.random.split(key)

    # Small shapes consistent with the module's forward: x is (batch, n_feature).
    batch, n_feature, n_hidden, n_output = 8, 16, 32, 4

    x = jax.random.normal(kx, (batch, n_feature), jnp.float32)
    w1, b1, w2, b2 = init_params(kp, n_feature, n_hidden, n_output)

    params = prepare_params(w1, b1, w2, b2)   # pad once, outside the hot path
    out = jax.block_until_ready(cnn_forward(x, params))

    # Correctness check against a pure-JAX reference of the PyTorch forward.
    ref = jnp.maximum(x @ w1 + b1, 0.0) @ w2 + b2
    assert out.shape == (batch, n_output)
    assert jnp.allclose(out, ref, atol=1e-5, rtol=1e-5)

    print("KERNEL_OK")
</pallas_src>

<mosaic_0001>
module attributes {stable_mosaic.version = 11 : i64} {
  func.func @mlp_kernel(%arg0: i32, %arg1: i32, %arg2: memref<8x128xf32, #tpu.memory_space<vmem>>, %arg3: memref<128x128xf32, #tpu.memory_space<vmem>>, %arg4: memref<1x128xf32, #tpu.memory_space<vmem>>, %arg5: memref<128x128xf32, #tpu.memory_space<vmem>>, %arg6: memref<1x128xf32, #tpu.memory_space<vmem>>, %arg7: memref<8x128xf32, #tpu.memory_space<vmem>>, %arg8: memref<8x128xf32, #tpu.memory_space<vmem>>) attributes {dimension_semantics = [#tpu.dimension_semantics<parallel>, #tpu.dimension_semantics<arbitrary>], iteration_bounds = array<i64: 1, 1>, scalar_prefetch = 0 : i64, scratch_operands = 1 : i64, tpu.core_type = #tpu.core_type<tc>, window_params = [{transform_indices = @transform_0, window_bounds = array<i64: 8, 128>}, {pipeline_mode = #tpu.pipeline_mode<synchronous>, transform_indices = @transform_1, window_bounds = array<i64: 128, 128>}, {pipeline_mode = #tpu.pipeline_mode<synchronous>, transform_indices = @transform_2, window_bounds = array<i64: 1, 128>}, {pipeline_mode = #tpu.pipeline_mode<synchronous>, transform_indices = @transform_3, window_bounds = array<i64: 128, 128>}, {pipeline_mode = #tpu.pipeline_mode<synchronous>, transform_indices = @transform_4, window_bounds = array<i64: 1, 128>}, {transform_indices = @transform_5, window_bounds = array<i64: 8, 128>}]} {
    %c0_i32 = arith.constant 0 : i32
    %0 = arith.cmpi eq, %arg1, %c0_i32 : i32
    %1 = arith.extui %0 : i1 to i32
    %c0_i32_0 = arith.constant 0 : i32
    %2 = arith.cmpi ne, %1, %c0_i32_0 : i32
    scf.if %2 {
      %cst_16 = arith.constant 0.000000e+00 : f32
      %19 = vector.broadcast %cst_16 : f32 to vector<8x128xf32>
      %c0_17 = arith.constant 0 : index
      %c0_18 = arith.constant 0 : index
      %20 = vector.load %arg8[%c0_17, %c0_18] : memref<8x128xf32, #tpu.memory_space<vmem>>, vector<8x128xf32>
      tpu.vector_store %arg8[%c0_17, %c0_18], %19 {strides = array<i32>} : memref<8x128xf32, #tpu.memory_space<vmem>>, vector<8x128xf32>,
    } else {
    }
    %c0 = arith.constant 0 : index
    %c0_1 = arith.constant 0 : index
    %3 = vector.load %arg2[%c0, %c0_1] : memref<8x128xf32, #tpu.memory_space<vmem>>, vector<8x128xf32>
    %c0_2 = arith.constant 0 : index
    %c0_3 = arith.constant 0 : index
    %4 = vector.load %arg3[%c0_2, %c0_3] : memref<128x128xf32, #tpu.memory_space<vmem>>, vector<128x128xf32>
    %cst = arith.constant dense<0.000000e+00> : vector<8x128xf32>
    %5 = tpu.matmul %3, %4, %cst {dimension_numbers = #tpu.dot_dimension_numbers<[1], [0], [0], [1], [0, 0, 1, 1], [], []>} : vector<8x128xf32>, vector<128x128xf32>, vector<8x128xf32> -> vector<8x128xf32>
    %c0_4 = arith.constant 0 : index
    %c0_5 = arith.constant 0 : index
    %6 = vector.load %arg4[%c0_4, %c0_5] : memref<1x128xf32, #tpu.memory_space<vmem>>, vector<1x128xf32>
    %7 = vector.broadcast %6 : vector<1x128xf32> to vector<8x128xf32>
    %8 = arith.addf %5, %7 : vector<8x128xf32>
    %cst_6 = arith.constant 0.000000e+00 : f32
    %9 = vector.broadcast %cst_6 : f32 to vector<8x128xf32>
    %10 = arith.maximumf %8, %9 : vector<8x128xf32>
    %c0_7 = arith.constant 0 : index
    %c0_8 = arith.constant 0 : index
    %11 = vector.load %arg8[%c0_7, %c0_8] : memref<8x128xf32, #tpu.memory_space<vmem>>, vector<8x128xf32>
    %c0_9 = arith.constant 0 : index
    %c0_10 = arith.constant 0 : index
    %12 = vector.load %arg5[%c0_9, %c0_10] : memref<128x128xf32, #tpu.memory_space<vmem>>, vector<128x128xf32>
    %cst_11 = arith.constant dense<0.000000e+00> : vector<8x128xf32>
    %13 = tpu.matmul %10, %12, %cst_11 {dimension_numbers = #tpu.dot_dimension_numbers<[1], [0], [0], [1], [0, 0, 1, 1], [], []>} : vector<8x128xf32>, vector<128x128xf32>, vector<8x128xf32> -> vector<8x128xf32>
    %14 = arith.addf %11, %13 : vector<8x128xf32>
    %c0_12 = arith.constant 0 : index
    %c0_13 = arith.constant 0 : index
    %15 = vector.load %arg8[%c0_12, %c0_13] : memref<8x128xf32, #tpu.memory_space<vmem>>, vector<8x128xf32>
    tpu.vector_store %arg8[%c0_12, %c0_13], %14 {strides = array<i32>} : memref<8x128xf32, #tpu.memory_space<vmem>>, vector<8x128xf32>,
    %c0_i32_14 = arith.constant 0 : i32
    %16 = arith.cmpi eq, %arg1, %c0_i32_14 : i32
    %17 = arith.extui %16 : i1 to i32
    %c0_i32_15 = arith.constant 0 : i32
    %18 = arith.cmpi ne, %17, %c0_i32_15 : i32
    scf.if %18 {
      %c0_16 = arith.constant 0 : index
      %c0_17 = arith.constant 0 : index
      %19 = vector.load %arg6[%c0_16, %c0_17] : memref<1x128xf32, #tpu.memory_space<vmem>>, vector<1x128xf32>
      %c0_18 = arith.constant 0 : index
      %c0_19 = arith.constant 0 : index
      %20 = vector.load %arg8[%c0_18, %c0_19] : memref<8x128xf32, #tpu.memory_space<vmem>>, vector<8x128xf32>
      %21 = vector.broadcast %19 : vector<1x128xf32> to vector<8x128xf32>
      %22 = arith.addf %20, %21 : vector<8x128xf32>
      %c0_20 = arith.constant 0 : index
      %c0_21 = arith.constant 0 : index
      %23 = vector.load %arg7[%c0_20, %c0_21] : memref<8x128xf32, #tpu.memory_space<vmem>>, vector<8x128xf32>
      tpu.vector_store %arg7[%c0_20, %c0_21], %22 {strides = array<i32>} : memref<8x128xf32, #tpu.memory_space<vmem>>, vector<8x128xf32>,
    } else {
    }
    return
  }
  func.func @transform_0(%arg0: i32, %arg1: i32) -> (i32, i32) {
    %c0_i32 = arith.constant 0 : i32
    %c0_i32_0 = arith.constant 0 : i32
    return %arg0, %c0_i32 : i32, i32
  }
  func.func @transform_1(%arg0: i32, %arg1: i32) -> (i32, i32) {
    %c0_i32 = arith.constant 0 : i32
    %c0_i32_0 = arith.constant 0 : i32
    return %c0_i32, %arg1 : i32, i32
  }
  func.func @transform_2(%arg0: i32, %arg1: i32) -> (i32, i32) {
    %c0_i32 = arith.constant 0 : i32
    %c0_i32_0 = arith.constant 0 : i32
    return %c0_i32, %arg1 : i32, i32
  }
  func.func @transform_3(%arg0: i32, %arg1: i32) -> (i32, i32) {
    %c0_i32 = arith.constant 0 : i32
    %c0_i32_0 = arith.constant 0 : i32
    return %arg1, %c0_i32 : i32, i32
  }
  func.func @transform_4(%arg0: i32, %arg1: i32) -> (i32, i32) {
    %c0_i32 = arith.constant 0 : i32
    %c0_i32_0 = arith.constant 0 : i32
    %c0_i32_1 = arith.constant 0 : i32
    return %c0_i32, %c0_i32_0 : i32, i32
  }
  func.func @transform_5(%arg0: i32, %arg1: i32) -> (i32, i32) {
    %c0_i32 = arith.constant 0 : i32
    %c0_i32_0 = arith.constant 0 : i32
    return %arg0, %c0_i32 : i32, i32
  }
}

module attributes {stable_mosaic.version = 11 : i64} {
  func.func @mlp_kernel(%arg0: i32, %arg1: i32, %arg2: memref<8x128xf32, #tpu.memory_space<vmem>>, %arg3: memref<128x128xf32, #tpu.memory_space<vmem>>, %arg4: memref<1x128xf32, #tpu.memory_space<vmem>>, %arg5: memref<128x128xf32, #tpu.memory_space<vmem>>, %arg6: memref<1x128xf32, #tpu.memory_space<vmem>>, %arg7: memref<8x128xf32, #tpu.memory_space<vmem>>, %arg8: memref<8x128xf32, #tpu.memory_space<vmem>>) attributes {dimension_semantics = [#tpu.dimension_semantics<parallel>, #tpu.dimension_semantics<arbitrary>], iteration_bounds = array<i64: 1, 1>, scalar_prefetch = 0 : i64, scratch_operands = 1 : i64, tpu.core_type = #tpu.core_type<tc>, window_params = [{transform_indices = @transform_0, window_bounds = array<i64: 8, 128>}, {transform_indices = @transform_1, window_bounds = array<i64: 128, 128>}, {transform_indices = @transform_2, window_bounds = array<i64: 1, 128>}, {transform_indices = @transform_3, window_bounds = array<i64: 128, 128>}, {pipeline_mode = #tpu.pipeline_mode<synchronous>, transform_indices = @transform_4, window_bounds = array<i64: 1, 128>}, {transform_indices = @transform_5, window_bounds = array<i64: 8, 128>}]} {
    %c0_i32 = arith.constant 0 : i32
    %0 = arith.cmpi eq, %arg1, %c0_i32 : i32
    %1 = arith.extui %0 : i1 to i32
    %c0_i32_0 = arith.constant 0 : i32
    %2 = arith.cmpi ne, %1, %c0_i32_0 : i32
    scf.if %2 {
      %cst_16 = arith.constant 0.000000e+00 : f32
      %19 = vector.broadcast %cst_16 : f32 to vector<8x128xf32>
      %c0_17 = arith.constant 0 : index
      %c0_18 = arith.constant 0 : index
      %20 = vector.load %arg8[%c0_17, %c0_18] : memref<8x128xf32, #tpu.memory_space<vmem>>, vector<8x128xf32>
      tpu.vector_store %arg8[%c0_17, %c0_18], %19 {strides = array<i32>} : memref<8x128xf32, #tpu.memory_space<vmem>>, vector<8x128xf32>,
    } else {
    }
    %c0 = arith.constant 0 : index
    %c0_1 = arith.constant 0 : index
    %3 = vector.load %arg2[%c0, %c0_1] : memref<8x128xf32, #tpu.memory_space<vmem>>, vector<8x128xf32>
    %c0_2 = arith.constant 0 : index
    %c0_3 = arith.constant 0 : index
    %4 = vector.load %arg3[%c0_2, %c0_3] : memref<128x128xf32, #tpu.memory_space<vmem>>, vector<128x128xf32>
    %cst = arith.constant dense<0.000000e+00> : vector<8x128xf32>
    %5 = tpu.matmul %3, %4, %cst {dimension_numbers = #tpu.dot_dimension_numbers<[1], [0], [0], [1], [0, 0, 1, 1], [], []>} : vector<8x128xf32>, vector<128x128xf32>, vector<8x128xf32> -> vector<8x128xf32>
    %c0_4 = arith.constant 0 : index
    %c0_5 = arith.constant 0 : index
    %6 = vector.load %arg4[%c0_4, %c0_5] : memref<1x128xf32, #tpu.memory_space<vmem>>, vector<1x128xf32>
    %7 = vector.broadcast %6 : vector<1x128xf32> to vector<8x128xf32>
    %8 = arith.addf %5, %7 : vector<8x128xf32>
    %cst_6 = arith.constant 0.000000e+00 : f32
    %9 = vector.broadcast %cst_6 : f32 to vector<8x128xf32>
    %10 = arith.maximumf %8, %9 : vector<8x128xf32>
    %c0_7 = arith.constant 0 : index
    %c0_8 = arith.constant 0 : index
    %11 = vector.load %arg8[%c0_7, %c0_8] : memref<8x128xf32, #tpu.memory_space<vmem>>, vector<8x128xf32>
    %c0_9 = arith.constant 0 : index
    %c0_10 = arith.constant 0 : index
    %12 = vector.load %arg5[%c0_9, %c0_10] : memref<128x128xf32, #tpu.memory_space<vmem>>, vector<128x128xf32>
    %cst_11 = arith.constant dense<0.000000e+00> : vector<8x128xf32>
    %13 = tpu.matmul %10, %12, %cst_11 {dimension_numbers = #tpu.dot_dimension_numbers<[1], [0], [0], [1], [0, 0, 1, 1], [], []>} : vector<8x128xf32>, vector<128x128xf32>, vector<8x128xf32> -> vector<8x128xf32>
    %14 = arith.addf %11, %13 : vector<8x128xf32>
    %c0_12 = arith.constant 0 : index
    %c0_13 = arith.constant 0 : index
    %15 = vector.load %arg8[%c0_12, %c0_13] : memref<8x128xf32, #tpu.memory_space<vmem>>, vector<8x128xf32>
    tpu.vector_store %arg8[%c0_12, %c0_13], %14 {strides = array<i32>} : memref<8x128xf32, #tpu.memory_space<vmem>>, vector<8x128xf32>,
    %c0_i32_14 = arith.constant 0 : i32
    %16 = arith.cmpi eq, %arg1, %c0_i32_14 : i32
    %17 = arith.extui %16 : i1 to i32
    %c0_i32_15 = arith.constant 0 : i32
    %18 = arith.cmpi ne, %17, %c0_i32_15 : i32
    scf.if %18 {
      %c0_16 = arith.constant 0 : index
      %c0_17 = arith.constant 0 : index
      %19 = vector.load %arg6[%c0_16, %c0_17] : memref<1x128xf32, #tpu.memory_space<vmem>>, vector<1x128xf32>
      %c0_18 = arith.constant 0 : index
      %c0_19 = arith.constant 0 : index
      %20 = vector.load %arg8[%c0_18, %c0_19] : memref<8x128xf32, #tpu.memory_space<vmem>>, vector<8x128xf32>
      %21 = vector.broadcast %19 : vector<1x128xf32> to vector<8x128xf32>
      %22 = arith.addf %20, %21 : vector<8x128xf32>
      %c0_20 = arith.constant 0 : index
      %c0_21 = arith.constant 0 : index
      %23 = vector.load %arg7[%c0_20, %c0_21] : memref<8x128xf32, #tpu.memory_space<vmem>>, vector<8x128xf32>
      tpu.vector_store %arg7[%c0_20, %c0_21], %22 {strides = array<i32>} : memref<8x128xf32, #tpu.memory_space<vmem>>, vector<8x128xf32>,
    } else {
    }
    return
  }
  func.func @transform_0(%arg0: i32, %arg1: i32) -> (i32, i32) {
    %c0_i32 = arith.constant 0 : i32
    %c0_i32_0 = arith.constant 0 : i32
    return %arg0, %c0_i32 : i32, i32
  }
  func.func @transform_1(%arg0: i32, %arg1: i32) -> (i32, i32) {
    %c0_i32 = arith.constant 0 : i32
    %c0_i32_0 = arith.constant 0 : i32
    return %c0_i32, %arg1 : i32, i32
  }
  func.func @transform_2(%arg0: i32, %arg1: i32) -> (i32, i32) {
    %c0_i32 = arith.constant 0 : i32
    %c0_i32_0 = arith.constant 0 : i32
    return %c0_i32, %arg1 : i32, i32
  }
  func.func @transform_3(%arg0: i32, %arg1: i32) -> (i32, i32) {
    %c0_i32 = arith.constant 0 : i32
    %c0_i32_0 = arith.constant 0 : i32
    return %arg1, %c0_i32 : i32, i32
  }
  func.func @transform_4(%arg0: i32, %arg1: i32) -> (i32, i32) {
    %c0_i32 = arith.constant 0 : i32
    %c0_i32_0 = arith.constant 0 : i32
    %c0_i32_1 = arith.constant 0 : i32
    return %c0_i32, %c0_i32_0 : i32, i32
  }
  func.func @transform_5(%arg0: i32, %arg1: i32) -> (i32, i32) {
    %c0_i32 = arith.constant 0 : i32
    %c0_i32_0 = arith.constant 0 : i32
    return %arg0, %c0_i32 : i32, i32
  }
}

</mosaic_0001>

<llo_original>
// kernel: tpu_custom_call.1
$region0: #{tpu_custom_call.1}
  #allocation0 [shape = 'u32[]', space=smem, size = 0x4, offset = 0x4, fixed_abs, tag = 'smem constant byte address 0x4 - core index']
  #allocation1 [shape = 'u32[144,128]{1,0:T(1,128)}', space=vmem, size = 0x12000, scoped, tag = 'internal scratch']
  #allocation2 [shape = 'f32[8,128]{1,0:T(8,128)}', space=vmem, size = 0x1000, scoped, tag = 'scratch operand']
  %s0 = inlined_call_operand.hbm [shape: f32[8,128], index: 0, kind: input, shape index: {}]
  %s1 = inlined_call_operand.hbm [shape: f32[128,128], index: 1, kind: input, shape index: {}]
  %s2 = inlined_call_operand.vmem [shape: f32[1,128], index: 2, kind: input, shape index: {}]
  %s3 = inlined_call_operand.hbm [shape: f32[128,128], index: 3, kind: input, shape index: {}]
  %s4 = inlined_call_operand.vmem [shape: f32[1,128], index: 4, kind: input, shape index: {}]
  %s5 = inlined_call_operand.hbm [shape: f32[8,128], index: 5, kind: output, shape index: {}]
  %s6 = sld [smem:[#allocation0]]
  $region50: #{tpu_custom_call.1} parent=0
    _
  %s8 = ssub.s32 1, %s6
  %s9 = scalar_select 0, %s8, %s6
  $region1: #{tpu_custom_call.1} parent=0
    #allocation3 [shape = 'u8[4096]{0}', space=vmem, size = 0x1000, scoped, tag = 'input window, operand 0, single buffered']
    #allocation4 [shape = 's32[1]{0}', space=sflag, size = 0x4, scoped, tag = 'scoped memory for tpu_custom_call.1']
    #allocation5 [shape = 's32[1]{0}', space=sflag, size = 0x4, scoped, tag = 'scoped memory for tpu_custom_call.1']
    #allocation6 [shape = 'u8[65536]{0}', space=vmem, size = 0x10000, scoped, tag = 'input window, operand 1, single buffered']
    #allocation7 [shape = 's32[1]{0}', space=sflag, size = 0x4, scoped, tag = 'scoped memory for tpu_custom_call.1']
    #allocation8 [shape = 'u8[65536]{0}', space=vmem, size = 0x10000, scoped, tag = 'input window, operand 3, single buffered']
    #allocation9 [shape = 'u8[4096]{0}', space=vmem, size = 0x1000, scoped, tag = 'output window, operand 0, single buffered']
    %10 = vsyncpa [#allocation4], 0
    %11 = vsyncpa [#allocation7], 0
    %12 = vsyncpa [#allocation5], 0
    // Predicated region
    $region2: #{tpu_custom_call.1} parent=1 // pred_check
      _
    $region3: #{tpu_custom_call.1} parent=1 // pred_check_branch
      %14 = sbr.rel (0) target = $region5
    $region4: #{tpu_custom_call.1} parent=1 // pred_region
      %s16 = ssub.s32 128, 128
      %17 = vsyncadd [#allocation4], %s16
      %s19 = sshll.u32 [#allocation3], 4
      %s20 = int_to_ptr.vmem [resolvable:$true] %s19
      %22 = dma.hbm_to_vmem [thread:$0]  %s0, 128, %s20, [#allocation4]
    $region5: #{tpu_custom_call.1} parent=1 // pred_fallthru
      _
    // Predicated region
    $region6: #{tpu_custom_call.1} parent=1 // pred_check
      _
    $region7: #{tpu_custom_call.1} parent=1 // pred_check_branch
      %24 = sbr.rel (0) target = $region9
    $region8: #{tpu_custom_call.1} parent=1 // pred_region
      %s26 = ssub.s32 2048, 2048
      %27 = vsyncadd [#allocation7], %s26
      %s28 = sshll.u32 [#allocation6], 4
      %s29 = int_to_ptr.vmem [resolvable:$true] %s28
      %34 = dma.hbm_to_vmem [thread:$0]  %s1, 2048, %s29, [#allocation7], 128, 128, 8
    $region9: #{tpu_custom_call.1} parent=1 // pred_fallthru
      _
    // Predicated region
    $region10: #{tpu_custom_call.1} parent=1 // pred_check
      _
    $region11: #{tpu_custom_call.1} parent=1 // pred_check_branch
      %36 = sbr.rel (0) target = $region13
    $region12: #{tpu_custom_call.1} parent=1 // pred_region
      _
    $region13: #{tpu_custom_call.1} parent=1 // pred_fallthru
      _
    // Predicated region
    $region14: #{tpu_custom_call.1} parent=1 // pred_check
      _
    $region15: #{tpu_custom_call.1} parent=1 // pred_check_branch
      %38 = sbr.rel (0) target = $region17
    $region16: #{tpu_custom_call.1} parent=1 // pred_region
      %s40 = ssub.s32 2048, 2048
      %41 = vsyncadd [#allocation7], %s40
      %s42 = sshll.u32 [#allocation8], 4
      %s43 = int_to_ptr.vmem [resolvable:$true] %s42
      %48 = dma.hbm_to_vmem [thread:$0]  %s3, 2048, %s43, [#allocation7], 128, 128, 8
    $region17: #{tpu_custom_call.1} parent=1 // pred_fallthru
      _
    // Predicated region
    $region18: #{tpu_custom_call.1} parent=1 // pred_check
      _
    $region19: #{tpu_custom_call.1} parent=1 // pred_check_branch
      %50 = sbr.rel (0) target = $region21
    $region20: #{tpu_custom_call.1} parent=1 // pred_region
      _
    $region21: #{tpu_custom_call.1} parent=1 // pred_fallthru
      _
    // Predicated region
    $region22: #{tpu_custom_call.1} parent=1 // pred_check
      _
    $region23: #{tpu_custom_call.1} parent=1 // pred_check_branch
      %52 = sbr.rel (0) target = $region25
    $region24: #{tpu_custom_call.1} parent=1 // pred_region
      %53 = dma.done [#allocation4], 128
    $region25: #{tpu_custom_call.1} parent=1 // pred_fallthru
      _
    // Predicated region
    $region26: #{tpu_custom_call.1} parent=1 // pred_check
      _
    $region27: #{tpu_custom_call.1} parent=1 // pred_check_branch
      %55 = sbr.rel (0) target = $region29
    $region28: #{tpu_custom_call.1} parent=1 // pred_region
      %56 = dma.done [#allocation7], 2048
    $region29: #{tpu_custom_call.1} parent=1 // pred_fallthru
      _
    // Predicated region
    $region30: #{tpu_custom_call.1} parent=1 // pred_check
      _
    $region31: #{tpu_custom_call.1} parent=1 // pred_check_branch
      %58 = sbr.rel (0) target = $region33
    $region32: #{tpu_custom_call.1} parent=1 // pred_region
      %59 = dma.done [#allocation7], 2048
    $region33: #{tpu_custom_call.1} parent=1 // pred_fallthru
      _
    %p60 = scmp.eq.s32.totalorder 0, 0
    // Predicated region
    $region34: #{tpu_custom_call.1} parent=1 // pred_check
      %p61 = pneg %p60
    $region35: #{tpu_custom_call.1} parent=1 // pred_check_branch
      %63 = sbr.rel (%p61) target = $region37
    $region36: #{tpu_custom_call.1} parent=1 // pred_region
      %64 = vst [vmem:[#allocation2] sm:$0xff] 0.0
    $region37: #{tpu_custom_call.1} parent=1 // pred_fallthru
      _
    %v65 = vld [vmem:[#allocation3] sm:$0xff]
    %v66 = vld [vmem:[#allocation6] sm:$0xff]
    %v67 = vld [vmem:[#allocation6 + $0x8] sm:$0xff]
    %v68 = vld [vmem:[#allocation6 + $0x10] sm:$0xff]
    %v69 = vld [vmem:[#allocation6 + $0x18] sm:$0xff]
    %v70 = vld [vmem:[#allocation6 + $0x20] sm:$0xff]
    %v71 = vld [vmem:[#allocation6 + $0x28] sm:$0xff]
    %v72 = vld [vmem:[#allocation6 + $0x30] sm:$0xff]
    %v73 = vld [vmem:[#allocation6 + $0x38] sm:$0xff]
    %v74 = vld [vmem:[#allocation6 + $0x40] sm:$0xff]
    %v75 = vld [vmem:[#allocation6 + $0x48] sm:$0xff]
    %v76 = vld [vmem:[#allocation6 + $0x50] sm:$0xff]
    %v77 = vld [vmem:[#allocation6 + $0x58] sm:$0xff]
    %v78 = vld [vmem:[#allocation6 + $0x60] sm:$0xff]
    %v79 = vld [vmem:[#allocation6 + $0x68] sm:$0xff]
    %v80 = vld [vmem:[#allocation6 + $0x70] sm:$0xff]
    %v81 = vld [vmem:[#allocation6 + $0x78] sm:$0xff]
    %v82 = vld [vmem:[%s2] sm:$0x1]
    %v84 = vlaneseq
    %v85 = vshrl.u32 %v84, 7
    %v86 = vsub.s32 0, %v85
    %v87 = vrot.slane %v82, %v86
    %89 = vmatprep.subr.mxu0 0.0
    %90 = vmatpush1.msra.mxu0 %v81
    %91 = vmatprep.subr.mxu0 0.0
    %92 = vmatpush1.msra.mxu0 %v80
    %93 = vmatprep.subr.mxu0 0.0
    %94 = vmatpush1.msra.mxu0 %v79
    %95 = vmatprep.subr.mxu0 0.0
    %96 = vmatpush1.msra.mxu0 %v78
    %97 = vmatprep.subr.mxu0 0.0
    %98 = vmatpush1.msra.mxu0 %v77
    %99 = vmatprep.subr.mxu0 0.0
    %100 = vmatpush1.msra.mxu0 %v76
    %101 = vmatprep.subr.mxu0 0.0
    %102 = vmatpush1.msra.mxu0 %v75
    %103 = vmatprep.subr.mxu0 0.0
    %104 = vmatpush1.msra.mxu0 %v74
    %105 = vmatprep.subr.mxu0 0.0
    %106 = vmatpush1.msra.mxu0 %v73
    %107 = vmatprep.subr.mxu0 0.0
    %108 = vmatpush1.msra.mxu0 %v72
    %109 = vmatprep.subr.mxu0 0.0
    %110 = vmatpush1.msra.mxu0 %v71
    %111 = vmatprep.subr.mxu0 0.0
    %112 = vmatpush1.msra.mxu0 %v70
    %113 = vmatprep.subr.mxu0 0.0
    %114 = vmatpush1.msra.mxu0 %v69
    %115 = vmatprep.subr.mxu0 0.0
    %116 = vmatpush1.msra.mxu0 %v68
    %117 = vmatprep.subr.mxu0 0.0
    %118 = vmatpush1.msra.mxu0 %v67
    %119 = vmatprep.subr.mxu0 0.0
    %120 = vmatpush1.msra.mxu0 %v66
    %121 = vmatprep.subr.mxu0 0.0
    %122 = vmatpush2.msra.mxu0 0.0
    %123 = vmatprep.subr.mxu0 0.0
    %124 = vmatpush2.msra.mxu0 0.0
    %125 = vmatprep.subr.mxu0 0.0
    %126 = vmatpush2.msra.mxu0 0.0
    %127 = vmatprep.subr.mxu0 0.0
    %128 = vmatpush2.msra.mxu0 0.0
    %129 = vmatprep.subr.mxu0 0.0
    %130 = vmatpush2.msra.mxu0 0.0
    %131 = vmatprep.subr.mxu0 0.0
    %132 = vmatpush2.msra.mxu0 0.0
    %133 = vmatprep.subr.mxu0 0.0
    %134 = vmatpush2.msra.mxu0 0.0
    %135 = vmatprep.subr.mxu0 0.0
    %136 = vmatpush2.msra.mxu0 0.0
    %137 = vmatprep.subr.mxu0 0.0
    %138 = vmatpush2.msra.mxu0 0.0
    %139 = vmatprep.subr.mxu0 0.0
    %140 = vmatpush2.msra.mxu0 0.0
    %141 = vmatprep.subr.mxu0 0.0
    %142 = vmatpush2.msra.mxu0 0.0
    %143 = vmatprep.subr.mxu0 0.0
    %144 = vmatpush2.msra.mxu0 0.0
    %145 = vmatprep.subr.mxu0 0.0
    %146 = vmatpush2.msra.mxu0 0.0
    %147 = vmatprep.subr.mxu0 0.0
    %148 = vmatpush2.msra.mxu0 0.0
    %149 = vmatprep.subr.mxu0 0.0
    %150 = vmatpush2.msra.mxu0 0.0
    %151 = vmatprep.subr.mxu0 0.0
    %152 = vmatpush2.msra.mxu0 0.0
    %153 = vmatprep.mubr.f32.mxu0 0.0
    %154 = vmatmul.mubr.f32.gmra.mxu0 %v65
    %v155 = vpop.f32.mrf.mxu0
    %v156 = vadd.f32 %v87, %v155
    %v157 = vpop.f32.mrf.mxu0
    %158 = vdwg.mxu0
    %v159 = vmax.f32 %v156, 0.0
    %v160 = vld [vmem:[#allocation2] sm:$0xff]
    %v161 = vld [vmem:[#allocation8] sm:$0xff]
    %v162 = vld [vmem:[#allocation8 + $0x8] sm:$0xff]
    %v163 = vld [vmem:[#allocation8 + $0x10] sm:$0xff]
    %v164 = vld [vmem:[#allocation8 + $0x18] sm:$0xff]
    %v165 = vld [vmem:[#allocation8 + $0x20] sm:$0xff]
    %v166 = vld [vmem:[#allocation8 + $0x28] sm:$0xff]
    %v167 = vld [vmem:[#allocation8 + $0x30] sm:$0xff]
    %v168 = vld [vmem:[#allocation8 + $0x38] sm:$0xff]
    %v169 = vld [vmem:[#allocation8 + $0x40] sm:$0xff]
    %v170 = vld [vmem:[#allocation8 + $0x48] sm:$0xff]
    %v171 = vld [vmem:[#allocation8 + $0x50] sm:$0xff]
    %v172 = vld [vmem:[#allocation8 + $0x58] sm:$0xff]
    %v173 = vld [vmem:[#allocation8 + $0x60] sm:$0xff]
    %v174 = vld [vmem:[#allocation8 + $0x68] sm:$0xff]
    %v175 = vld [vmem:[#allocation8 + $0x70] sm:$0xff]
    %v176 = vld [vmem:[#allocation8 + $0x78] sm:$0xff]
    %177 = vmatprep.subr.mxu0 0.0
    %178 = vmatpush1.msra.mxu0 %v176
    %179 = vmatprep.subr.mxu0 0.0
    %180 = vmatpush1.msra.mxu0 %v175
    %181 = vmatprep.subr.mxu0 0.0
    %182 = vmatpush1.msra.mxu0 %v174
    %183 = vmatprep.subr.mxu0 0.0
    %184 = vmatpush1.msra.mxu0 %v173
    %185 = vmatprep.subr.mxu0 0.0
    %186 = vmatpush1.msra.mxu0 %v172
    %187 = vmatprep.subr.mxu0 0.0
    %188 = vmatpush1.msra.mxu0 %v171
    %189 = vmatprep.subr.mxu0 0.0
    %190 = vmatpush1.msra.mxu0 %v170
    %191 = vmatprep.subr.mxu0 0.0
    %192 = vmatpush1.msra.mxu0 %v169
    %193 = vmatprep.subr.mxu0 0.0
    %194 = vmatpush1.msra.mxu0 %v168
    %195 = vmatprep.subr.mxu0 0.0
    %196 = vmatpush1.msra.mxu0 %v167
    %197 = vmatprep.subr.mxu0 0.0
    %198 = vmatpush1.msra.mxu0 %v166
    %199 = vmatprep.subr.mxu0 0.0
    %200 = vmatpush1.msra.mxu0 %v165
    %201 = vmatprep.subr.mxu0 0.0
    %202 = vmatpush1.msra.mxu0 %v164
    %203 = vmatprep.subr.mxu0 0.0
    %204 = vmatpush1.msra.mxu0 %v163
    %205 = vmatprep.subr.mxu0 0.0
    %206 = vmatpush1.msra.mxu0 %v162
    %207 = vmatprep.subr.mxu0 0.0
    %208 = vmatpush1.msra.mxu0 %v161
    %209 = vmatprep.subr.mxu0 0.0
    %210 = vmatpush2.msra.mxu0 0.0
    %211 = vmatprep.subr.mxu0 0.0
    %212 = vmatpush2.msra.mxu0 0.0
    %213 = vmatprep.subr.mxu0 0.0
    %214 = vmatpush2.msra.mxu0 0.0
    %215 = vmatprep.subr.mxu0 0.0
    %216 = vmatpush2.msra.mxu0 0.0
    %217 = vmatprep.subr.mxu0 0.0
    %218 = vmatpush2.msra.mxu0 0.0
    %219 = vmatprep.subr.mxu0 0.0
    %220 = vmatpush2.msra.mxu0 0.0
    %221 = vmatprep.subr.mxu0 0.0
    %222 = vmatpush2.msra.mxu0 0.0
    %223 = vmatprep.subr.mxu0 0.0
    %224 = vmatpush2.msra.mxu0 0.0
    %225 = vmatprep.subr.mxu0 0.0
    %226 = vmatpush2.msra.mxu0 0.0
    %227 = vmatprep.subr.mxu0 0.0
    %228 = vmatpush2.msra.mxu0 0.0
    %229 = vmatprep.subr.mxu0 0.0
    %230 = vmatpush2.msra.mxu0 0.0
    %231 = vmatprep.subr.mxu0 0.0
    %232 = vmatpush2.msra.mxu0 0.0
    %233 = vmatprep.subr.mxu0 0.0
    %234 = vmatpush2.msra.mxu0 0.0
    %235 = vmatprep.subr.mxu0 0.0
    %236 = vmatpush2.msra.mxu0 0.0
    %237 = vmatprep.subr.mxu0 0.0
    %238 = vmatpush2.msra.mxu0 0.0
    %239 = vmatprep.subr.mxu0 0.0
    %240 = vmatpush2.msra.mxu0 0.0
    %241 = vmatprep.mubr.f32.mxu0 0.0
    %242 = vmatmul.mubr.f32.gmra.mxu0 %v159
    %v243 = vpop.f32.mrf.mxu0
    %v244 = vadd.f32 0.0, %v243
    %v245 = vpop.f32.mrf.mxu0
    %246 = vdwg.mxu0
    %v247 = vadd.f32 %v160, %v244
    %248 = vst [vmem:[#allocation2] sm:$0xff] %v247
    // Predicated region
    $region38: #{tpu_custom_call.1} parent=1 // pred_check
      %p249 = pneg %p60
    $region39: #{tpu_custom_call.1} parent=1 // pred_check_branch
      %251 = sbr.rel (%p249) target = $region41
    $region40: #{tpu_custom_call.1} parent=1 // pred_region
      %v252 = vld [vmem:[%s4] sm:$0x1]
      %v253 = vld [vmem:[#allocation2] sm:$0xff]
      %v255 = vlaneseq
      %v256 = vshrl.u32 %v255, 7
      %v257 = vsub.s32 0, %v256
      %v258 = vrot.slane %v252, %v257
      %v260 = vadd.f32 %v253, %v258
      %261 = vst [vmem:[#allocation9] sm:$0xff] %v260
    $region41: #{tpu_custom_call.1} parent=1 // pred_fallthru
      _
    // Predicated region
    $region42: #{tpu_custom_call.1} parent=1 // pred_check
      _
    $region43: #{tpu_custom_call.1} parent=1 // pred_check_branch
      %263 = sbr.rel (0) target = $region45
    $region44: #{tpu_custom_call.1} parent=1 // pred_region
      %s265 = ssub.s32 128, 128
      %266 = vsyncadd [#allocation5], %s265
      %s268 = sshll.u32 [#allocation9], 4
      %s269 = int_to_ptr.vmem [resolvable:$true] %s268
      %271 = dma.vmem_to_hbm [thread:$0]  %s269, 128, %s5, [#allocation5]
    $region45: #{tpu_custom_call.1} parent=1 // pred_fallthru
      _
    // Predicated region
    $region46: #{tpu_custom_call.1} parent=1 // pred_check
      _
    $region47: #{tpu_custom_call.1} parent=1 // pred_check_branch
      %273 = sbr.rel (0) target = $region49
    $region48: #{tpu_custom_call.1} parent=1 // pred_region
      %274 = dma.done [#allocation5], 128
    $region49: #{tpu_custom_call.1} parent=1 // pred_fallthru
      _
    %275 = vsyncpa [#allocation4], 1
    %276 = vsyncpa [#allocation7], 1
    %277 = vsyncpa [#allocation5], 1

// kernel: tpu_custom_call.1
$region0: #{tpu_custom_call.1}
  #allocation0 [shape = 'u32[]', space=smem, size = 0x4, offset = 0x4, fixed_abs, tag = 'smem constant byte address 0x4 - core index']
  #allocation1 [shape = 'u32[144,128]{1,0:T(1,128)}', space=vmem, size = 0x12000, scoped, tag = 'internal scratch']
  #allocation2 [shape = 'f32[8,128]{1,0:T(8,128)}', space=vmem, size = 0x1000, scoped, tag = 'scratch operand']
  %s0 = inlined_call_operand.hbm [shape: f32[8,128], index: 0, kind: input, shape index: {}]
  %s1 = inlined_call_operand.hbm [shape: f32[128,128], index: 1, kind: input, shape index: {}]
  %s2 = inlined_call_operand.vmem [shape: f32[1,128], index: 2, kind: input, shape index: {}]
  %s3 = inlined_call_operand.hbm [shape: f32[128,128], index: 3, kind: input, shape index: {}]
  %s4 = inlined_call_operand.vmem [shape: f32[1,128], index: 4, kind: input, shape index: {}]
  %s5 = inlined_call_operand.hbm [shape: f32[8,128], index: 5, kind: output, shape index: {}]
  %s6 = sld [smem:[#allocation0]]
  $region50: #{tpu_custom_call.1} parent=0
    _
  %s8 = ssub.s32 1, %s6
  %s9 = scalar_select 0, %s8, %s6
  $region1: #{tpu_custom_call.1} parent=0
    #allocation3 [shape = 'u8[4096]{0}', space=vmem, size = 0x1000, scoped, tag = 'input window, operand 0, single buffered']
    #allocation4 [shape = 's32[1]{0}', space=sflag, size = 0x4, scoped, tag = 'scoped memory for tpu_custom_call.1']
    #allocation5 [shape = 's32[1]{0}', space=sflag, size = 0x4, scoped, tag = 'scoped memory for tpu_custom_call.1']
    #allocation6 [shape = 'u8[65536]{0}', space=vmem, size = 0x10000, scoped, tag = 'input window, operand 1, single buffered']
    #allocation7 [shape = 's32[1]{0}', space=sflag, size = 0x4, scoped, tag = 'scoped memory for tpu_custom_call.1']
    #allocation8 [shape = 'u8[65536]{0}', space=vmem, size = 0x10000, scoped, tag = 'input window, operand 3, single buffered']
    #allocation9 [shape = 'u8[4096]{0}', space=vmem, size = 0x1000, scoped, tag = 'output window, operand 0, single buffered']
    %10 = vsyncpa [#allocation4], 0
    %11 = vsyncpa [#allocation7], 0
    %12 = vsyncpa [#allocation5], 0
    // Predicated region
    $region2: #{tpu_custom_call.1} parent=1 // pred_check
      _
    $region3: #{tpu_custom_call.1} parent=1 // pred_check_branch
      %14 = sbr.rel (0) target = $region5
    $region4: #{tpu_custom_call.1} parent=1 // pred_region
      %s16 = ssub.s32 128, 128
      %17 = vsyncadd [#allocation4], %s16
      %s19 = sshll.u32 [#allocation3], 4
      %s20 = int_to_ptr.vmem [resolvable:$true] %s19
      %22 = dma.hbm_to_vmem [thread:$0]  %s0, 128, %s20, [#allocation4]
    $region5: #{tpu_custom_call.1} parent=1 // pred_fallthru
      _
    // Predicated region
    $region6: #{tpu_custom_call.1} parent=1 // pred_check
      _
    $region7: #{tpu_custom_call.1} parent=1 // pred_check_branch
      %24 = sbr.rel (0) target = $region9
    $region8: #{tpu_custom_call.1} parent=1 // pred_region
      %s26 = ssub.s32 2048, 2048
      %27 = vsyncadd [#allocation7], %s26
      %s28 = sshll.u32 [#allocation6], 4
      %s29 = int_to_ptr.vmem [resolvable:$true] %s28
      %34 = dma.hbm_to_vmem [thread:$0]  %s1, 2048, %s29, [#allocation7], 128, 128, 8
    $region9: #{tpu_custom_call.1} parent=1 // pred_fallthru
      _
    // Predicated region
    $region10: #{tpu_custom_call.1} parent=1 // pred_check
      _
    $region11: #{tpu_custom_call.1} parent=1 // pred_check_branch
      %36 = sbr.rel (0) target = $region13
    $region12: #{tpu_custom_call.1} parent=1 // pred_region
      _
    $region13: #{tpu_custom_call.1} parent=1 // pred_fallthru
      _
    // Predicated region
    $region14: #{tpu_custom_call.1} parent=1 // pred_check
      _
    $region15: #{tpu_custom_call.1} parent=1 // pred_check_branch
      %38 = sbr.rel (0) target = $region17
    $region16: #{tpu_custom_call.1} parent=1 // pred_region
      %s40 = ssub.s32 2048, 2048
      %41 = vsyncadd [#allocation7], %s40
      %s42 = sshll.u32 [#allocation8], 4
      %s43 = int_to_ptr.vmem [resolvable:$true] %s42
      %48 = dma.hbm_to_vmem [thread:$0]  %s3, 2048, %s43, [#allocation7], 128, 128, 8
    $region17: #{tpu_custom_call.1} parent=1 // pred_fallthru
      _
    // Predicated region
    $region18: #{tpu_custom_call.1} parent=1 // pred_check
      _
    $region19: #{tpu_custom_call.1} parent=1 // pred_check_branch
      %50 = sbr.rel (0) target = $region21
    $region20: #{tpu_custom_call.1} parent=1 // pred_region
      _
    $region21: #{tpu_custom_call.1} parent=1 // pred_fallthru
      _
    // Predicated region
    $region22: #{tpu_custom_call.1} parent=1 // pred_check
      _
    $region23: #{tpu_custom_call.1} parent=1 // pred_check_branch
      %52 = sbr.rel (0) target = $region25
    $region24: #{tpu_custom_call.1} parent=1 // pred_region
      %53 = dma.done [#allocation4], 128
    $region25: #{tpu_custom_call.1} parent=1 // pred_fallthru
      _
    // Predicated region
    $region26: #{tpu_custom_call.1} parent=1 // pred_check
      _
    $region27: #{tpu_custom_call.1} parent=1 // pred_check_branch
      %55 = sbr.rel (0) target = $region29
    $region28: #{tpu_custom_call.1} parent=1 // pred_region
      %56 = dma.done [#allocation7], 2048
    $region29: #{tpu_custom_call.1} parent=1 // pred_fallthru
      _
    // Predicated region
    $region30: #{tpu_custom_call.1} parent=1 // pred_check
      _
    $region31: #{tpu_custom_call.1} parent=1 // pred_check_branch
      %58 = sbr.rel (0) target = $region33
    $region32: #{tpu_custom_call.1} parent=1 // pred_region
      %59 = dma.done [#allocation7], 2048
    $region33: #{tpu_custom_call.1} parent=1 // pred_fallthru
      _
    %p60 = scmp.eq.s32.totalorder 0, 0
    // Predicated region
    $region34: #{tpu_custom_call.1} parent=1 // pred_check
      %p61 = pneg %p60
    $region35: #{tpu_custom_call.1} parent=1 // pred_check_branch
      %63 = sbr.rel (%p61) target = $region37
    $region36: #{tpu_custom_call.1} parent=1 // pred_region
      %64 = vst [vmem:[#allocation2] sm:$0xff] 0.0
    $region37: #{tpu_custom_call.1} parent=1 // pred_fallthru
      _
    %v65 = vld [vmem:[#allocation3] sm:$0xff]
    %v66 = vld [vmem:[#allocation6] sm:$0xff]
    %v67 = vld [vmem:[#allocation6 + $0x8] sm:$0xff]
    %v68 = vld [vmem:[#allocation6 + $0x10] sm:$0xff]
    %v69 = vld [vmem:[#allocation6 + $0x18] sm:$0xff]
    %v70 = vld [vmem:[#allocation6 + $0x20] sm:$0xff]
    %v71 = vld [vmem:[#allocation6 + $0x28] sm:$0xff]
    %v72 = vld [vmem:[#allocation6 + $0x30] sm:$0xff]
    %v73 = vld [vmem:[#allocation6 + $0x38] sm:$0xff]
    %v74 = vld [vmem:[#allocation6 + $0x40] sm:$0xff]
    %v75 = vld [vmem:[#allocation6 + $0x48] sm:$0xff]
    %v76 = vld [vmem:[#allocation6 + $0x50] sm:$0xff]
    %v77 = vld [vmem:[#allocation6 + $0x58] sm:$0xff]
    %v78 = vld [vmem:[#allocation6 + $0x60] sm:$0xff]
    %v79 = vld [vmem:[#allocation6 + $0x68] sm:$0xff]
    %v80 = vld [vmem:[#allocation6 + $0x70] sm:$0xff]
    %v81 = vld [vmem:[#allocation6 + $0x78] sm:$0xff]
    %v82 = vld [vmem:[%s2] sm:$0x1]
    %v84 = vlaneseq
    %v85 = vshrl.u32 %v84, 7
    %v86 = vsub.s32 0, %v85
    %v87 = vrot.slane %v82, %v86
    %89 = vmatprep.subr.mxu0 0.0
    %90 = vmatpush1.msra.mxu0 %v81
    %91 = vmatprep.subr.mxu0 0.0
    %92 = vmatpush1.msra.mxu0 %v80
    %93 = vmatprep.subr.mxu0 0.0
    %94 = vmatpush1.msra.mxu0 %v79
    %95 = vmatprep.subr.mxu0 0.0
    %96 = vmatpush1.msra.mxu0 %v78
    %97 = vmatprep.subr.mxu0 0.0
    %98 = vmatpush1.msra.mxu0 %v77
    %99 = vmatprep.subr.mxu0 0.0
    %100 = vmatpush1.msra.mxu0 %v76
    %101 = vmatprep.subr.mxu0 0.0
    %102 = vmatpush1.msra.mxu0 %v75
    %103 = vmatprep.subr.mxu0 0.0
    %104 = vmatpush1.msra.mxu0 %v74
    %105 = vmatprep.subr.mxu0 0.0
    %106 = vmatpush1.msra.mxu0 %v73
    %107 = vmatprep.subr.mxu0 0.0
    %108 = vmatpush1.msra.mxu0 %v72
    %109 = vmatprep.subr.mxu0 0.0
    %110 = vmatpush1.msra.mxu0 %v71
    %111 = vmatprep.subr.mxu0 0.0
    %112 = vmatpush1.msra.mxu0 %v70
    %113 = vmatprep.subr.mxu0 0.0
    %114 = vmatpush1.msra.mxu0 %v69
    %115 = vmatprep.subr.mxu0 0.0
    %116 = vmatpush1.msra.mxu0 %v68
    %117 = vmatprep.subr.mxu0 0.0
    %118 = vmatpush1.msra.mxu0 %v67
    %119 = vmatprep.subr.mxu0 0.0
    %120 = vmatpush1.msra.mxu0 %v66
    %121 = vmatprep.subr.mxu0 0.0
    %122 = vmatpush2.msra.mxu0 0.0
    %123 = vmatprep.subr.mxu0 0.0
    %124 = vmatpush2.msra.mxu0 0.0
    %125 = vmatprep.subr.mxu0 0.0
    %126 = vmatpush2.msra.mxu0 0.0
    %127 = vmatprep.subr.mxu0 0.0
    %128 = vmatpush2.msra.mxu0 0.0
    %129 = vmatprep.subr.mxu0 0.0
    %130 = vmatpush2.msra.mxu0 0.0
    %131 = vmatprep.subr.mxu0 0.0
    %132 = vmatpush2.msra.mxu0 0.0
    %133 = vmatprep.subr.mxu0 0.0
    %134 = vmatpush2.msra.mxu0 0.0
    %135 = vmatprep.subr.mxu0 0.0
    %136 = vmatpush2.msra.mxu0 0.0
    %137 = vmatprep.subr.mxu0 0.0
    %138 = vmatpush2.msra.mxu0 0.0
    %139 = vmatprep.subr.mxu0 0.0
    %140 = vmatpush2.msra.mxu0 0.0
    %141 = vmatprep.subr.mxu0 0.0
    %142 = vmatpush2.msra.mxu0 0.0
    %143 = vmatprep.subr.mxu0 0.0
    %144 = vmatpush2.msra.mxu0 0.0
    %145 = vmatprep.subr.mxu0 0.0
    %146 = vmatpush2.msra.mxu0 0.0
    %147 = vmatprep.subr.mxu0 0.0
    %148 = vmatpush2.msra.mxu0 0.0
    %149 = vmatprep.subr.mxu0 0.0
    %150 = vmatpush2.msra.mxu0 0.0
    %151 = vmatprep.subr.mxu0 0.0
    %152 = vmatpush2.msra.mxu0 0.0
    %153 = vmatprep.mubr.f32.mxu0 0.0
    %154 = vmatmul.mubr.f32.gmra.mxu0 %v65
    %v155 = vpop.f32.mrf.mxu0
    %v156 = vadd.f32 %v87, %v155
    %v157 = vpop.f32.mrf.mxu0
    %158 = vdwg.mxu0
    %v159 = vmax.f32 %v156, 0.0
    %v160 = vld [vmem:[#allocation2] sm:$0xff]
    %v161 = vld [vmem:[#allocation8] sm:$0xff]
    %v162 = vld [vmem:[#allocation8 + $0x8] sm:$0xff]
    %v163 = vld [vmem:[#allocation8 + $0x10] sm:$0xff]
    %v164 = vld [vmem:[#allocation8 + $0x18] sm:$0xff]
    %v165 = vld [vmem:[#allocation8 + $0x20] sm:$0xff]
    %v166 = vld [vmem:[#allocation8 + $0x28] sm:$0xff]
    %v167 = vld [vmem:[#allocation8 + $0x30] sm:$0xff]
    %v168 = vld [vmem:[#allocation8 + $0x38] sm:$0xff]
    %v169 = vld [vmem:[#allocation8 + $0x40] sm:$0xff]
    %v170 = vld [vmem:[#allocation8 + $0x48] sm:$0xff]
    %v171 = vld [vmem:[#allocation8 + $0x50] sm:$0xff]
    %v172 = vld [vmem:[#allocation8 + $0x58] sm:$0xff]
    %v173 = vld [vmem:[#allocation8 + $0x60] sm:$0xff]
    %v174 = vld [vmem:[#allocation8 + $0x68] sm:$0xff]
    %v175 = vld [vmem:[#allocation8 + $0x70] sm:$0xff]
    %v176 = vld [vmem:[#allocation8 + $0x78] sm:$0xff]
    %177 = vmatprep.subr.mxu0 0.0
    %178 = vmatpush1.msra.mxu0 %v176
    %179 = vmatprep.subr.mxu0 0.0
    %180 = vmatpush1.msra.mxu0 %v175
    %181 = vmatprep.subr.mxu0 0.0
    %182 = vmatpush1.msra.mxu0 %v174
    %183 = vmatprep.subr.mxu0 0.0
    %184 = vmatpush1.msra.mxu0 %v173
    %185 = vmatprep.subr.mxu0 0.0
    %186 = vmatpush1.msra.mxu0 %v172
    %187 = vmatprep.subr.mxu0 0.0
    %188 = vmatpush1.msra.mxu0 %v171
    %189 = vmatprep.subr.mxu0 0.0
    %190 = vmatpush1.msra.mxu0 %v170
    %191 = vmatprep.subr.mxu0 0.0
    %192 = vmatpush1.msra.mxu0 %v169
    %193 = vmatprep.subr.mxu0 0.0
    %194 = vmatpush1.msra.mxu0 %v168
    %195 = vmatprep.subr.mxu0 0.0
    %196 = vmatpush1.msra.mxu0 %v167
    %197 = vmatprep.subr.mxu0 0.0
    %198 = vmatpush1.msra.mxu0 %v166
    %199 = vmatprep.subr.mxu0 0.0
    %200 = vmatpush1.msra.mxu0 %v165
    %201 = vmatprep.subr.mxu0 0.0
    %202 = vmatpush1.msra.mxu0 %v164
    %203 = vmatprep.subr.mxu0 0.0
    %204 = vmatpush1.msra.mxu0 %v163
    %205 = vmatprep.subr.mxu0 0.0
    %206 = vmatpush1.msra.mxu0 %v162
    %207 = vmatprep.subr.mxu0 0.0
    %208 = vmatpush1.msra.mxu0 %v161
    %209 = vmatprep.subr.mxu0 0.0
    %210 = vmatpush2.msra.mxu0 0.0
    %211 = vmatprep.subr.mxu0 0.0
    %212 = vmatpush2.msra.mxu0 0.0
    %213 = vmatprep.subr.mxu0 0.0
    %214 = vmatpush2.msra.mxu0 0.0
    %215 = vmatprep.subr.mxu0 0.0
    %216 = vmatpush2.msra.mxu0 0.0
    %217 = vmatprep.subr.mxu0 0.0
    %218 = vmatpush2.msra.mxu0 0.0
    %219 = vmatprep.subr.mxu0 0.0
    %220 = vmatpush2.msra.mxu0 0.0
    %221 = vmatprep.subr.mxu0 0.0
    %222 = vmatpush2.msra.mxu0 0.0
    %223 = vmatprep.subr.mxu0 0.0
    %224 = vmatpush2.msra.mxu0 0.0
    %225 = vmatprep.subr.mxu0 0.0
    %226 = vmatpush2.msra.mxu0 0.0
    %227 = vmatprep.subr.mxu0 0.0
    %228 = vmatpush2.msra.mxu0 0.0
    %229 = vmatprep.subr.mxu0 0.0
    %230 = vmatpush2.msra.mxu0 0.0
    %231 = vmatprep.subr.mxu0 0.0
    %232 = vmatpush2.msra.mxu0 0.0
    %233 = vmatprep.subr.mxu0 0.0
    %234 = vmatpush2.msra.mxu0 0.0
    %235 = vmatprep.subr.mxu0 0.0
    %236 = vmatpush2.msra.mxu0 0.0
    %237 = vmatprep.subr.mxu0 0.0
    %238 = vmatpush2.msra.mxu0 0.0
    %239 = vmatprep.subr.mxu0 0.0
    %240 = vmatpush2.msra.mxu0 0.0
    %241 = vmatprep.mubr.f32.mxu0 0.0
    %242 = vmatmul.mubr.f32.gmra.mxu0 %v159
    %v243 = vpop.f32.mrf.mxu0
    %v244 = vadd.f32 0.0, %v243
    %v245 = vpop.f32.mrf.mxu0
    %246 = vdwg.mxu0
    %v247 = vadd.f32 %v160, %v244
    %248 = vst [vmem:[#allocation2] sm:$0xff] %v247
    // Predicated region
    $region38: #{tpu_custom_call.1} parent=1 // pred_check
      %p249 = pneg %p60
    $region39: #{tpu_custom_call.1} parent=1 // pred_check_branch
      %251 = sbr.rel (%p249) target = $region41
    $region40: #{tpu_custom_call.1} parent=1 // pred_region
      %v252 = vld [vmem:[%s4] sm:$0x1]
      %v253 = vld [vmem:[#allocation2] sm:$0xff]
      %v255 = vlaneseq
      %v256 = vshrl.u32 %v255, 7
      %v257 = vsub.s32 0, %v256
      %v258 = vrot.slane %v252, %v257
      %v260 = vadd.f32 %v253, %v258
      %261 = vst [vmem:[#allocation9] sm:$0xff] %v260
    $region41: #{tpu_custom_call.1} parent=1 // pred_fallthru
      _
    // Predicated region
    $region42: #{tpu_custom_call.1} parent=1 // pred_check
      _
    $region43: #{tpu_custom_call.1} parent=1 // pred_check_branch
      %263 = sbr.rel (0) target = $region45
    $region44: #{tpu_custom_call.1} parent=1 // pred_region
      %s265 = ssub.s32 128, 128
      %266 = vsyncadd [#allocation5], %s265
      %s268 = sshll.u32 [#allocation9], 4
      %s269 = int_to_ptr.vmem [resolvable:$true] %s268
      %271 = dma.vmem_to_hbm [thread:$0]  %s269, 128, %s5, [#allocation5]
    $region45: #{tpu_custom_call.1} parent=1 // pred_fallthru
      _
    // Predicated region
    $region46: #{tpu_custom_call.1} parent=1 // pred_check
      _
    $region47: #{tpu_custom_call.1} parent=1 // pred_check_branch
      %273 = sbr.rel (0) target = $region49
    $region48: #{tpu_custom_call.1} parent=1 // pred_region
      %274 = dma.done [#allocation5], 128
    $region49: #{tpu_custom_call.1} parent=1 // pred_fallthru
      _
    %275 = vsyncpa [#allocation4], 1
    %276 = vsyncpa [#allocation7], 1
    %277 = vsyncpa [#allocation5], 1

</llo_original>
